<compile_context>
chip_gen: v7x
topology: tpu7x:2x2x1
jax: 0.10.0
libtpu: 0.0.40
codegen_flags: <defaults>
</compile_context>

<pallas_src>
import jax
import jax.numpy as jnp
from jax.experimental import pallas as pl
from jax.experimental.pallas import tpu as pltpu


def _round_up(x, m):
    return ((x + m - 1) // m) * m


def _mlp_kernel(x_ref,
                w1_ref, b1_ref,
                w2_ref, b2_ref,
                w3_ref, b3_ref,
                w4_ref, b4_ref,
                w5_ref, b5_ref,
                o_ref):
    """One batch tile: 5 fused MXU matmuls + VPU bias/ReLU, f32 accumulation."""
    cd = w1_ref.dtype  # MXU input dtype (f32 or bf16); accumulation is always f32.
    h = x_ref[...].astype(cd)
    h = jnp.dot(h, w1_ref[...], preferred_element_type=jnp.float32) + b1_ref[...]
    h = jnp.maximum(h, 0.0).astype(cd)
    h = jnp.dot(h, w2_ref[...], preferred_element_type=jnp.float32) + b2_ref[...]
    h = jnp.maximum(h, 0.0).astype(cd)
    h = jnp.dot(h, w3_ref[...], preferred_element_type=jnp.float32) + b3_ref[...]
    h = jnp.maximum(h, 0.0).astype(cd)
    h = jnp.dot(h, w4_ref[...], preferred_element_type=jnp.float32) + b4_ref[...]
    h = jnp.maximum(h, 0.0).astype(cd)
    h = jnp.dot(h, w5_ref[...], preferred_element_type=jnp.float32) + b5_ref[...]
    o_ref[...] = h.astype(o_ref.dtype)


def sso_net_forward(x, params, *, block_batch=256):
    """x: (B, num_feature). params: w1..w5 stored as (in, out) (= PyTorch W.T),
    b1..b5 stored as (1, out) float32. Weights may be f32 or bf16."""
    B, F = x.shape
    num_class = params["w5"].shape[1]

    # ---- lane-dense final layer: pad class dim up to a multiple of 128 ------
    n_pad = _round_up(num_class, 128)
    w5, b5 = params["w5"], params["b5"]
    if n_pad != num_class:
        w5 = jnp.pad(w5, ((0, 0), (0, n_pad - num_class)))
        b5 = jnp.pad(b5, ((0, 0), (0, n_pad - num_class)))

    # ---- batch tiling: Bt rows per grid step, padded to a whole tile --------
    bt = _round_up(max(8, min(block_batch, _round_up(B, 8))), 8)
    b_pad = _round_up(B, bt)
    if b_pad != B:
        x = jnp.pad(x, ((0, b_pad - B), (0, 0)))
    grid = (pl.cdiv(b_pad, bt),)

    def _resident(shape):
        # Whole-array block, same block for every grid step -> stays in VMEM.
        return pl.BlockSpec(shape, lambda i: (0, 0))

    in_specs = [
        pl.BlockSpec((bt, F), lambda i: (i, 0)),          # x: streamed over batch
        _resident(params["w1"].shape), _resident(params["b1"].shape),
        _resident(params["w2"].shape), _resident(params["b2"].shape),
        _resident(params["w3"].shape), _resident(params["b3"].shape),
        _resident(params["w4"].shape), _resident(params["b4"].shape),
        _resident(w5.shape), _resident(b5.shape),
    ]
    out_spec = pl.BlockSpec((bt, n_pad), lambda i: (i, 0))

    out = pl.pallas_call(
        _mlp_kernel,
        grid=grid,
        in_specs=in_specs,
        out_specs=out_spec,
        out_shape=jax.ShapeDtypeStruct((b_pad, n_pad), jnp.float32),
        compiler_params=pltpu.CompilerParams(
            dimension_semantics=("parallel",)),  # shard batch tiles across TCs on v7x
    )(x,
      params["w1"], params["b1"],
      params["w2"], params["b2"],
      params["w3"], params["b3"],
      params["w4"], params["b4"],
      w5, b5)

    return out[:B, :num_class]


def init_params(key, num_feature, num_class):
    """Deterministic synthetic init. Weights stored as (in, out) == PyTorch W.T."""
    dims = [num_feature, 512, 256, 128, 64, num_class]
    params = {}
    for i in range(5):
        kin, kout = dims[i], dims[i + 1]
        key, kw, kb = jax.random.split(key, 3)
        bound = 1.0 / jnp.sqrt(kin)  # nn.Linear default U(-1/sqrt(in), 1/sqrt(in))
        params[f"w{i + 1}"] = jax.random.uniform(
            kw, (kin, kout), jnp.float32, minval=-bound, maxval=bound)
        params[f"b{i + 1}"] = jax.random.uniform(
            kb, (1, kout), jnp.float32, minval=-bound, maxval=bound)
    return params


def cast_weights(params, dtype):
    """Cast matmul weights to `dtype` (bf16 on v6e/v7x); biases stay f32."""
    out = {}
    for i in range(1, 6):
        out[f"w{i}"] = params[f"w{i}"].astype(dtype)
        out[f"b{i}"] = params[f"b{i}"].astype(jnp.float32)
    return out


def reference_forward(x, params):
    h = x
    for i in range(1, 5):
        h = jnp.maximum(h @ params[f"w{i}"].astype(jnp.float32)
                        + params[f"b{i}"], 0.0)
    return h @ params["w5"].astype(jnp.float32) + params["b5"]


if __name__ == "__main__":
    num_feature = 32
    num_class = 10

    key = jax.random.PRNGKey(0)
    key, kp = jax.random.split(key)
    params = init_params(kp, num_feature, num_class)

    # 1) Tiny batch (single padded tile), f32 weights — tight match vs reference.
    key, kx = jax.random.split(key)
    x_small = jax.random.normal(kx, (8, num_feature), jnp.float32)
    out = jax.block_until_ready(sso_net_forward(x_small, params))
    ref = reference_forward(x_small, params)
    assert out.shape == (8, num_class)
    assert jnp.allclose(out, ref, atol=1e-4, rtol=1e-4), "f32 small-batch mismatch"

    # 2) Ragged batch (exercises batch zero-padding), f32 weights.
    key, kx = jax.random.split(key)
    x_rag = jax.random.normal(kx, (37, num_feature), jnp.float32)
    out = jax.block_until_ready(sso_net_forward(x_rag, params))
    ref = reference_forward(x_rag, params)
    assert out.shape == (37, num_class)
    assert jnp.allclose(out, ref, atol=1e-4, rtol=1e-4), "f32 ragged-batch mismatch"

    # 3) Multi-tile batch grid + bf16 weights (v6e/v7x fast path), f32 accum.
    key, kx = jax.random.split(key)
    x_big = jax.random.normal(kx, (512, num_feature), jnp.float32)
    out = jax.block_until_ready(
        sso_net_forward(x_big, cast_weights(params, jnp.bfloat16)))
    ref = reference_forward(x_big, params)
    assert out.shape == (512, num_class)
    assert jnp.allclose(out, ref, atol=7e-2, rtol=7e-2), "bf16 big-batch mismatch"

    print("KERNEL_OK")
</pallas_src>

<mosaic_0001>
module attributes {stable_mosaic.version = 11 : i64} {
  func.func @_mlp_kernel(%arg0: i32, %arg1: memref<8x32xf32, #tpu.memory_space<vmem>>, %arg2: memref<32x512xf32, #tpu.memory_space<vmem>>, %arg3: memref<1x512xf32, #tpu.memory_space<vmem>>, %arg4: memref<512x256xf32, #tpu.memory_space<vmem>>, %arg5: memref<1x256xf32, #tpu.memory_space<vmem>>, %arg6: memref<256x128xf32, #tpu.memory_space<vmem>>, %arg7: memref<1x128xf32, #tpu.memory_space<vmem>>, %arg8: memref<128x64xf32, #tpu.memory_space<vmem>>, %arg9: memref<1x64xf32, #tpu.memory_space<vmem>>, %arg10: memref<64x128xf32, #tpu.memory_space<vmem>>, %arg11: memref<1x128xf32, #tpu.memory_space<vmem>>, %arg12: memref<8x128xf32, #tpu.memory_space<vmem>>) attributes {dimension_semantics = [#tpu.dimension_semantics<parallel>], iteration_bounds = array<i64: 1>, scalar_prefetch = 0 : i64, scratch_operands = 0 : i64, tpu.core_type = #tpu.core_type<tc>, window_params = [{transform_indices = @transform_0, window_bounds = array<i64: 8, 32>}, {pipeline_mode = #tpu.pipeline_mode<synchronous>, transform_indices = @transform_1, window_bounds = array<i64: 32, 512>}, {pipeline_mode = #tpu.pipeline_mode<synchronous>, transform_indices = @transform_2, window_bounds = array<i64: 1, 512>}, {pipeline_mode = #tpu.pipeline_mode<synchronous>, transform_indices = @transform_3, window_bounds = array<i64: 512, 256>}, {pipeline_mode = #tpu.pipeline_mode<synchronous>, transform_indices = @transform_4, window_bounds = array<i64: 1, 256>}, {pipeline_mode = #tpu.pipeline_mode<synchronous>, transform_indices = @transform_5, window_bounds = array<i64: 256, 128>}, {pipeline_mode = #tpu.pipeline_mode<synchronous>, transform_indices = @transform_6, window_bounds = array<i64: 1, 128>}, {pipeline_mode = #tpu.pipeline_mode<synchronous>, transform_indices = @transform_7, window_bounds = array<i64: 128, 64>}, {pipeline_mode = #tpu.pipeline_mode<synchronous>, transform_indices = @transform_8, window_bounds = array<i64: 1, 64>}, {pipeline_mode = #tpu.pipeline_mode<synchronous>, transform_indices = @transform_9, window_bounds = array<i64: 64, 128>}, {pipeline_mode = #tpu.pipeline_mode<synchronous>, transform_indices = @transform_10, window_bounds = array<i64: 1, 128>}, {transform_indices = @transform_11, window_bounds = array<i64: 8, 128>}]} {
    %c0 = arith.constant 0 : index
    %c0_0 = arith.constant 0 : index
    %0 = vector.load %arg1[%c0, %c0_0] : memref<8x32xf32, #tpu.memory_space<vmem>>, vector<8x32xf32>
    %c0_1 = arith.constant 0 : index
    %c0_2 = arith.constant 0 : index
    %1 = vector.load %arg2[%c0_1, %c0_2] : memref<32x512xf32, #tpu.memory_space<vmem>>, vector<32x512xf32>
    %cst = arith.constant dense<0.000000e+00> : vector<8x512xf32>
    %2 = tpu.matmul %0, %1, %cst {dimension_numbers = #tpu.dot_dimension_numbers<[1], [0], [0], [1], [0, 0, 1, 1], [], []>} : vector<8x32xf32>, vector<32x512xf32>, vector<8x512xf32> -> vector<8x512xf32>
    %c0_3 = arith.constant 0 : index
    %c0_4 = arith.constant 0 : index
    %3 = vector.load %arg3[%c0_3, %c0_4] : memref<1x512xf32, #tpu.memory_space<vmem>>, vector<1x512xf32>
    %4 = vector.broadcast %3 : vector<1x512xf32> to vector<8x512xf32>
    %5 = arith.addf %2, %4 : vector<8x512xf32>
    %cst_5 = arith.constant 0.000000e+00 : f32
    %6 = vector.broadcast %cst_5 : f32 to vector<8x512xf32>
    %7 = arith.maximumf %5, %6 : vector<8x512xf32>
    %c0_6 = arith.constant 0 : index
    %c0_7 = arith.constant 0 : index
    %8 = vector.load %arg4[%c0_6, %c0_7] : memref<512x256xf32, #tpu.memory_space<vmem>>, vector<512x256xf32>
    %cst_8 = arith.constant dense<0.000000e+00> : vector<8x256xf32>
    %9 = tpu.matmul %7, %8, %cst_8 {dimension_numbers = #tpu.dot_dimension_numbers<[1], [0], [0], [1], [0, 0, 1, 1], [], []>} : vector<8x512xf32>, vector<512x256xf32>, vector<8x256xf32> -> vector<8x256xf32>
    %c0_9 = arith.constant 0 : index
    %c0_10 = arith.constant 0 : index
    %10 = vector.load %arg5[%c0_9, %c0_10] : memref<1x256xf32, #tpu.memory_space<vmem>>, vector<1x256xf32>
    %11 = vector.broadcast %10 : vector<1x256xf32> to vector<8x256xf32>
    %12 = arith.addf %9, %11 : vector<8x256xf32>
    %cst_11 = arith.constant 0.000000e+00 : f32
    %13 = vector.broadcast %cst_11 : f32 to vector<8x256xf32>
    %14 = arith.maximumf %12, %13 : vector<8x256xf32>
    %c0_12 = arith.constant 0 : index
    %c0_13 = arith.constant 0 : index
    %15 = vector.load %arg6[%c0_12, %c0_13] : memref<256x128xf32, #tpu.memory_space<vmem>>, vector<256x128xf32>
    %cst_14 = arith.constant dense<0.000000e+00> : vector<8x128xf32>
    %16 = tpu.matmul %14, %15, %cst_14 {dimension_numbers = #tpu.dot_dimension_numbers<[1], [0], [0], [1], [0, 0, 1, 1], [], []>} : vector<8x256xf32>, vector<256x128xf32>, vector<8x128xf32> -> vector<8x128xf32>
    %c0_15 = arith.constant 0 : index
    %c0_16 = arith.constant 0 : index
    %17 = vector.load %arg7[%c0_15, %c0_16] : memref<1x128xf32, #tpu.memory_space<vmem>>, vector<1x128xf32>
    %18 = vector.broadcast %17 : vector<1x128xf32> to vector<8x128xf32>
    %19 = arith.addf %16, %18 : vector<8x128xf32>
    %cst_17 = arith.constant 0.000000e+00 : f32
    %20 = vector.broadcast %cst_17 : f32 to vector<8x128xf32>
    %21 = arith.maximumf %19, %20 : vector<8x128xf32>
    %c0_18 = arith.constant 0 : index
    %c0_19 = arith.constant 0 : index
    %22 = vector.load %arg8[%c0_18, %c0_19] : memref<128x64xf32, #tpu.memory_space<vmem>>, vector<128x64xf32>
    %cst_20 = arith.constant dense<0.000000e+00> : vector<8x64xf32>
    %23 = tpu.matmul %21, %22, %cst_20 {dimension_numbers = #tpu.dot_dimension_numbers<[1], [0], [0], [1], [0, 0, 1, 1], [], []>} : vector<8x128xf32>, vector<128x64xf32>, vector<8x64xf32> -> vector<8x64xf32>
    %c0_21 = arith.constant 0 : index
    %c0_22 = arith.constant 0 : index
    %24 = vector.load %arg9[%c0_21, %c0_22] : memref<1x64xf32, #tpu.memory_space<vmem>>, vector<1x64xf32>
    %25 = vector.broadcast %24 : vector<1x64xf32> to vector<8x64xf32>
    %26 = arith.addf %23, %25 : vector<8x64xf32>
    %cst_23 = arith.constant 0.000000e+00 : f32
    %27 = vector.broadcast %cst_23 : f32 to vector<8x64xf32>
    %28 = arith.maximumf %26, %27 : vector<8x64xf32>
    %c0_24 = arith.constant 0 : index
    %c0_25 = arith.constant 0 : index
    %29 = vector.load %arg10[%c0_24, %c0_25] : memref<64x128xf32, #tpu.memory_space<vmem>>, vector<64x128xf32>
    %cst_26 = arith.constant dense<0.000000e+00> : vector<8x128xf32>
    %30 = tpu.matmul %28, %29, %cst_26 {dimension_numbers = #tpu.dot_dimension_numbers<[1], [0], [0], [1], [0, 0, 1, 1], [], []>} : vector<8x64xf32>, vector<64x128xf32>, vector<8x128xf32> -> vector<8x128xf32>
    %c0_27 = arith.constant 0 : index
    %c0_28 = arith.constant 0 : index
    %31 = vector.load %arg11[%c0_27, %c0_28] : memref<1x128xf32, #tpu.memory_space<vmem>>, vector<1x128xf32>
    %32 = vector.broadcast %31 : vector<1x128xf32> to vector<8x128xf32>
    %33 = arith.addf %30, %32 : vector<8x128xf32>
    %c0_29 = arith.constant 0 : index
    %c0_30 = arith.constant 0 : index
    %34 = vector.load %arg12[%c0_29, %c0_30] : memref<8x128xf32, #tpu.memory_space<vmem>>, vector<8x128xf32>
    tpu.vector_store %arg12[%c0_29, %c0_30], %33 {strides = array<i32>} : memref<8x128xf32, #tpu.memory_space<vmem>>, vector<8x128xf32>,
    return
  }
  func.func @transform_0(%arg0: i32) -> (i32, i32) {
    %c0_i32 = arith.constant 0 : i32
    %c0_i32_0 = arith.constant 0 : i32
    return %arg0, %c0_i32 : i32, i32
  }
  func.func @transform_1(%arg0: i32) -> (i32, i32) {
    %c0_i32 = arith.constant 0 : i32
    %c0_i32_0 = arith.constant 0 : i32
    %c0_i32_1 = arith.constant 0 : i32
    return %c0_i32, %c0_i32_0 : i32, i32
  }
  func.func @transform_2(%arg0: i32) -> (i32, i32) {
    %c0_i32 = arith.constant 0 : i32
    %c0_i32_0 = arith.constant 0 : i32
    %c0_i32_1 = arith.constant 0 : i32
    return %c0_i32, %c0_i32_0 : i32, i32
  }
  func.func @transform_3(%arg0: i32) -> (i32, i32) {
    %c0_i32 = arith.constant 0 : i32
    %c0_i32_0 = arith.constant 0 : i32
    %c0_i32_1 = arith.constant 0 : i32
    return %c0_i32, %c0_i32_0 : i32, i32
  }
  func.func @transform_4(%arg0: i32) -> (i32, i32) {
    %c0_i32 = arith.constant 0 : i32
    %c0_i32_0 = arith.constant 0 : i32
    %c0_i32_1 = arith.constant 0 : i32
    return %c0_i32, %c0_i32_0 : i32, i32
  }
  func.func @transform_5(%arg0: i32) -> (i32, i32) {
    %c0_i32 = arith.constant 0 : i32
    %c0_i32_0 = arith.constant 0 : i32
    %c0_i32_1 = arith.constant 0 : i32
    return %c0_i32, %c0_i32_0 : i32, i32
  }
  func.func @transform_6(%arg0: i32) -> (i32, i32) {
    %c0_i32 = arith.constant 0 : i32
    %c0_i32_0 = arith.constant 0 : i32
    %c0_i32_1 = arith.constant 0 : i32
    return %c0_i32, %c0_i32_0 : i32, i32
  }
  func.func @transform_7(%arg0: i32) -> (i32, i32) {
    %c0_i32 = arith.constant 0 : i32
    %c0_i32_0 = arith.constant 0 : i32
    %c0_i32_1 = arith.constant 0 : i32
    return %c0_i32, %c0_i32_0 : i32, i32
  }
  func.func @transform_8(%arg0: i32) -> (i32, i32) {
    %c0_i32 = arith.constant 0 : i32
    %c0_i32_0 = arith.constant 0 : i32
    %c0_i32_1 = arith.constant 0 : i32
    return %c0_i32, %c0_i32_0 : i32, i32
  }
  func.func @transform_9(%arg0: i32) -> (i32, i32) {
    %c0_i32 = arith.constant 0 : i32
    %c0_i32_0 = arith.constant 0 : i32
    %c0_i32_1 = arith.constant 0 : i32
    return %c0_i32, %c0_i32_0 : i32, i32
  }
  func.func @transform_10(%arg0: i32) -> (i32, i32) {
    %c0_i32 = arith.constant 0 : i32
    %c0_i32_0 = arith.constant 0 : i32
    %c0_i32_1 = arith.constant 0 : i32
    return %c0_i32, %c0_i32_0 : i32, i32
  }
  func.func @transform_11(%arg0: i32) -> (i32, i32) {
    %c0_i32 = arith.constant 0 : i32
    %c0_i32_0 = arith.constant 0 : i32
    return %arg0, %c0_i32 : i32, i32
  }
}

</mosaic_0001>

<llo_original>
// kernel: tpu_custom_call.1
$region0: #{tpu_custom_call.1}
  #allocation0 [shape = 'u32[]', space=smem, size = 0x4, offset = 0x4, fixed_abs, tag = 'smem constant byte address 0x4 - core index']
  #allocation1 [shape = 'u32[144,128]{1,0:T(1,128)}', space=vmem, size = 0x12000, scoped, tag = 'internal scratch']
  %s0 = inlined_call_operand.hbm [shape: f32[8,32], index: 0, kind: input, shape index: {}]
  %s1 = inlined_call_operand.vmem [shape: f32[32,512], index: 1, kind: input, shape index: {}]
  %s2 = inlined_call_operand.vmem [shape: f32[1,512], index: 2, kind: input, shape index: {}]
  %s3 = inlined_call_operand.hbm [shape: f32[512,256], index: 3, kind: input, shape index: {}]
  %s4 = inlined_call_operand.vmem [shape: f32[1,256], index: 4, kind: input, shape index: {}]
  %s5 = inlined_call_operand.hbm [shape: f32[256,128], index: 5, kind: input, shape index: {}]
  %s6 = inlined_call_operand.vmem [shape: f32[1,128], index: 6, kind: input, shape index: {}]
  %s7 = inlined_call_operand.vmem [shape: f32[128,64], index: 7, kind: input, shape index: {}]
  %s8 = inlined_call_operand.vmem [shape: f32[1,64], index: 8, kind: input, shape index: {}]
  %s9 = inlined_call_operand.vmem [shape: f32[64,128], index: 9, kind: input, shape index: {}]
  %s10 = inlined_call_operand.vmem [shape: f32[1,128], index: 10, kind: input, shape index: {}]
  %s11 = inlined_call_operand.hbm [shape: f32[8,128], index: 11, kind: output, shape index: {}]
  %s12 = sld [smem:[#allocation0]]
  $region66: #{tpu_custom_call.1} parent=0
    _
  %s14 = ssub.s32 1, %s12
  %s15 = scalar_select 0, %s14, %s12
  $region1: #{tpu_custom_call.1} parent=0
    #allocation2 [shape = 'u8[4096]{0}', space=vmem, size = 0x1000, scoped, tag = 'input window, operand 0, single buffered']
    #allocation3 [shape = 's32[1]{0}', space=sflag, size = 0x4, scoped, tag = 'scoped memory for tpu_custom_call.1']
    #allocation4 [shape = 's32[1]{0}', space=sflag, size = 0x4, scoped, tag = 'scoped memory for tpu_custom_call.1']
    #allocation5 [shape = 'u8[524288]{0}', space=vmem, size = 0x80000, scoped, tag = 'input window, operand 3, single buffered']
    #allocation6 [shape = 's32[1]{0}', space=sflag, size = 0x4, scoped, tag = 'scoped memory for tpu_custom_call.1']
    #allocation7 [shape = 'u8[131072]{0}', space=vmem, size = 0x20000, scoped, tag = 'input window, operand 5, single buffered']
    #allocation8 [shape = 'u8[4096]{0}', space=vmem, size = 0x1000, scoped, tag = 'output window, operand 0, single buffered']
    %16 = vsyncpa [#allocation3], 0
    %17 = vsyncpa [#allocation6], 0
    %18 = vsyncpa [#allocation4], 0
    // Predicated region
    $region2: #{tpu_custom_call.1} parent=1 // pred_check
      _
    $region3: #{tpu_custom_call.1} parent=1 // pred_check_branch
      %20 = sbr.rel (0) target = $region5
    $region4: #{tpu_custom_call.1} parent=1 // pred_region
      %s22 = ssub.s32 128, 128
      %23 = vsyncadd [#allocation3], %s22
      %s25 = sshll.u32 [#allocation2], 4
      %s26 = int_to_ptr.vmem [resolvable:$true] %s25
      %28 = dma.hbm_to_vmem [thread:$0]  %s0, 128, %s26, [#allocation3]
    $region5: #{tpu_custom_call.1} parent=1 // pred_fallthru
      _
    // Predicated region
    $region6: #{tpu_custom_call.1} parent=1 // pred_check
      _
    $region7: #{tpu_custom_call.1} parent=1 // pred_check_branch
      %30 = sbr.rel (0) target = $region9
    $region8: #{tpu_custom_call.1} parent=1 // pred_region
      _
    $region9: #{tpu_custom_call.1} parent=1 // pred_fallthru
      _
    // Predicated region
    $region10: #{tpu_custom_call.1} parent=1 // pred_check
      _
    $region11: #{tpu_custom_call.1} parent=1 // pred_check_branch
      %32 = sbr.rel (0) target = $region13
    $region12: #{tpu_custom_call.1} parent=1 // pred_region
      _
    $region13: #{tpu_custom_call.1} parent=1 // pred_fallthru
      _
    // Predicated region
    $region14: #{tpu_custom_call.1} parent=1 // pred_check
      _
    $region15: #{tpu_custom_call.1} parent=1 // pred_check_branch
      %34 = sbr.rel (0) target = $region17
    $region16: #{tpu_custom_call.1} parent=1 // pred_region
      %s36 = ssub.s32 16384, 16384
      %37 = vsyncadd [#allocation6], %s36
      %s38 = sshll.u32 [#allocation5], 4
      %s39 = int_to_ptr.vmem [resolvable:$true] %s38
      %44 = dma.hbm_to_vmem [thread:$0]  %s3, 16384, %s39, [#allocation6], 256, 256, 16
    $region17: #{tpu_custom_call.1} parent=1 // pred_fallthru
      _
    // Predicated region
    $region18: #{tpu_custom_call.1} parent=1 // pred_check
      _
    $region19: #{tpu_custom_call.1} parent=1 // pred_check_branch
      %46 = sbr.rel (0) target = $region21
    $region20: #{tpu_custom_call.1} parent=1 // pred_region
      _
    $region21: #{tpu_custom_call.1} parent=1 // pred_fallthru
      _
    // Predicated region
    $region22: #{tpu_custom_call.1} parent=1 // pred_check
      _
    $region23: #{tpu_custom_call.1} parent=1 // pred_check_branch
      %48 = sbr.rel (0) target = $region25
    $region24: #{tpu_custom_call.1} parent=1 // pred_region
      %s50 = ssub.s32 4096, 4096
      %51 = vsyncadd [#allocation6], %s50
      %s52 = sshll.u32 [#allocation7], 4
      %s53 = int_to_ptr.vmem [resolvable:$true] %s52
      %58 = dma.hbm_to_vmem [thread:$0]  %s5, 4096, %s53, [#allocation6], 128, 128, 8
    $region25: #{tpu_custom_call.1} parent=1 // pred_fallthru
      _
    // Predicated region
    $region26: #{tpu_custom_call.1} parent=1 // pred_check
      _
    $region27: #{tpu_custom_call.1} parent=1 // pred_check_branch
      %60 = sbr.rel (0) target = $region29
    $region28: #{tpu_custom_call.1} parent=1 // pred_region
      _
    $region29: #{tpu_custom_call.1} parent=1 // pred_fallthru
      _
    // Predicated region
    $region30: #{tpu_custom_call.1} parent=1 // pred_check
      _
    $region31: #{tpu_custom_call.1} parent=1 // pred_check_branch
      %62 = sbr.rel (0) target = $region33
    $region32: #{tpu_custom_call.1} parent=1 // pred_region
      _
    $region33: #{tpu_custom_call.1} parent=1 // pred_fallthru
      _
    // Predicated region
    $region34: #{tpu_custom_call.1} parent=1 // pred_check
      _
    $region35: #{tpu_custom_call.1} parent=1 // pred_check_branch
      %64 = sbr.rel (0) target = $region37
    $region36: #{tpu_custom_call.1} parent=1 // pred_region
      _
    $region37: #{tpu_custom_call.1} parent=1 // pred_fallthru
      _
    // Predicated region
    $region38: #{tpu_custom_call.1} parent=1 // pred_check
      _
    $region39: #{tpu_custom_call.1} parent=1 // pred_check_branch
      %66 = sbr.rel (0) target = $region41
    $region40: #{tpu_custom_call.1} parent=1 // pred_region
      _
    $region41: #{tpu_custom_call.1} parent=1 // pred_fallthru
      _
    // Predicated region
    $region42: #{tpu_custom_call.1} parent=1 // pred_check
      _
    $region43: #{tpu_custom_call.1} parent=1 // pred_check_branch
      %68 = sbr.rel (0) target = $region45
    $region44: #{tpu_custom_call.1} parent=1 // pred_region
      _
    $region45: #{tpu_custom_call.1} parent=1 // pred_fallthru
      _
    // Predicated region
    $region46: #{tpu_custom_call.1} parent=1 // pred_check
      _
    $region47: #{tpu_custom_call.1} parent=1 // pred_check_branch
      %70 = sbr.rel (0) target = $region49
    $region48: #{tpu_custom_call.1} parent=1 // pred_region
      %71 = dma.done [#allocation3], 128
    $region49: #{tpu_custom_call.1} parent=1 // pred_fallthru
      _
    // Predicated region
    $region50: #{tpu_custom_call.1} parent=1 // pred_check
      _
    $region51: #{tpu_custom_call.1} parent=1 // pred_check_branch
      %73 = sbr.rel (0) target = $region53
    $region52: #{tpu_custom_call.1} parent=1 // pred_region
      %74 = dma.done [#allocation6], 16384
    $region53: #{tpu_custom_call.1} parent=1 // pred_fallthru
      _
    // Predicated region
    $region54: #{tpu_custom_call.1} parent=1 // pred_check
      _
    $region55: #{tpu_custom_call.1} parent=1 // pred_check_branch
      %76 = sbr.rel (0) target = $region57
    $region56: #{tpu_custom_call.1} parent=1 // pred_region
      %77 = dma.done [#allocation6], 4096
    $region57: #{tpu_custom_call.1} parent=1 // pred_fallthru
      _
    %v78 = vld [vmem:[#allocation2] sm:$0xff]
    %v79 = vld [vmem:[%s1] sm:$0xff]
    %v80 = vld [vmem:[%s1 + $0x8] sm:$0xff]
    %v81 = vld [vmem:[%s1 + $0x10] sm:$0xff]
    %v82 = vld [vmem:[%s1 + $0x18] sm:$0xff]
    %v83 = vld [vmem:[%s1 + $0x20] sm:$0xff]
    %v84 = vld [vmem:[%s1 + $0x28] sm:$0xff]
    %v85 = vld [vmem:[%s1 + $0x30] sm:$0xff]
    %v86 = vld [vmem:[%s1 + $0x38] sm:$0xff]
    %v87 = vld [vmem:[%s1 + $0x40] sm:$0xff]
    %v88 = vld [vmem:[%s1 + $0x48] sm:$0xff]
    %v89 = vld [vmem:[%s1 + $0x50] sm:$0xff]
    %v90 = vld [vmem:[%s1 + $0x58] sm:$0xff]
    %v91 = vld [vmem:[%s1 + $0x60] sm:$0xff]
    %v92 = vld [vmem:[%s1 + $0x68] sm:$0xff]
    %v93 = vld [vmem:[%s1 + $0x70] sm:$0xff]
    %v94 = vld [vmem:[%s1 + $0x78] sm:$0xff]
    %v95 = vld [vmem:[%s2] sm:$0xf]
    %v97 = vlaneseq
    %v98 = vshrl.u32 %v97, 7
    %v99 = vsub.s32 0, %v98
    %v100 = vrot.slane %v95, %v99
    %v101 = vlaneseq
    %v102 = vshrl.u32 %v101, 7
    %v103 = vsub.s32 1, %v102
    %v104 = vrot.slane %v95, %v103
    %v105 = vlaneseq
    %v106 = vshrl.u32 %v105, 7
    %v107 = vsub.s32 2, %v106
    %v108 = vrot.slane %v95, %v107
    %v109 = vlaneseq
    %v110 = vshrl.u32 %v109, 7
    %v111 = vsub.s32 3, %v110
    %v112 = vrot.slane %v95, %v111
    %vm117 = vcmask 261120
    %v119 = vsel %vm117, %v78, 0
    %121 = vmatprep.subr.mxu0 %v80
    %122 = vmatpush1.msra.mxu0 %v79
    %123 = vmatprep.subr.mxu0 %v84
    %124 = vmatpush1.msra.mxu0 %v83
    %125 = vmatprep.subr.mxu0 %v88
    %126 = vmatpush1.msra.mxu0 %v87
    %127 = vmatprep.subr.mxu0 %v92
    %128 = vmatpush1.msra.mxu0 %v91
    %129 = vmatprep.subr.mxu0 0.0
    %130 = vmatpush1.msra.mxu0 0.0
    %131 = vmatprep.subr.mxu0 0.0
    %132 = vmatpush1.msra.mxu0 0.0
    %133 = vmatprep.subr.mxu0 0.0
    %134 = vmatpush1.msra.mxu0 0.0
    %135 = vmatprep.subr.mxu0 0.0
    %136 = vmatpush1.msra.mxu0 0.0
    %137 = vmatprep.subr.mxu0 0.0
    %138 = vmatpush1.msra.mxu0 0.0
    %139 = vmatprep.subr.mxu0 0.0
    %140 = vmatpush1.msra.mxu0 0.0
    %141 = vmatprep.subr.mxu0 0.0
    %142 = vmatpush1.msra.mxu0 0.0
    %143 = vmatprep.subr.mxu0 0.0
    %144 = vmatpush1.msra.mxu0 0.0
    %145 = vmatprep.subr.mxu0 0.0
    %146 = vmatpush1.msra.mxu0 0.0
    %147 = vmatprep.subr.mxu0 0.0
    %148 = vmatpush1.msra.mxu0 0.0
    %149 = vmatprep.subr.mxu0 0.0
    %150 = vmatpush1.msra.mxu0 0.0
    %151 = vmatprep.subr.mxu0 0.0
    %152 = vmatpush1.msra.mxu0 0.0
    %153 = vmatprep.subr.mxu0 0.0
    %154 = vmatpush1.msra.mxu0 0.0
    %155 = vmatprep.subr.mxu0 0.0
    %156 = vmatpush1.msra.mxu0 0.0
    %157 = vmatprep.subr.mxu0 0.0
    %158 = vmatpush1.msra.mxu0 0.0
    %159 = vmatprep.subr.mxu0 0.0
    %160 = vmatpush1.msra.mxu0 0.0
    %161 = vmatprep.subr.mxu0 0.0
    %162 = vmatpush1.msra.mxu0 0.0
    %163 = vmatprep.subr.mxu0 0.0
    %164 = vmatpush1.msra.mxu0 0.0
    %165 = vmatprep.subr.mxu0 0.0
    %166 = vmatpush1.msra.mxu0 0.0
    %167 = vmatprep.subr.mxu0 0.0
    %168 = vmatpush1.msra.mxu0 0.0
    %169 = vmatprep.subr.mxu0 0.0
    %170 = vmatpush1.msra.mxu0 0.0
    %171 = vmatprep.subr.mxu0 0.0
    %172 = vmatpush1.msra.mxu0 0.0
    %173 = vmatprep.subr.mxu0 0.0
    %174 = vmatpush1.msra.mxu0 0.0
    %175 = vmatprep.subr.mxu0 0.0
    %176 = vmatpush1.msra.mxu0 0.0
    %177 = vmatprep.subr.mxu0 0.0
    %178 = vmatpush1.msra.mxu0 0.0
    %179 = vmatprep.subr.mxu0 0.0
    %180 = vmatpush1.msra.mxu0 0.0
    %181 = vmatprep.subr.mxu0 0.0
    %182 = vmatpush1.msra.mxu0 0.0
    %183 = vmatprep.subr.mxu0 0.0
    %184 = vmatpush1.msra.mxu0 0.0
    %185 = vmatprep.mubr.f32.mxu0 0.0
    %186 = vmatmul.mubr.f32.gmra.mrb[0].mxu0 %v119
    %v187 = vpop.f32.mrb[0].mxu0
    %v188 = vadd.f32 %v100, %v187
    %v189 = vpop.f32.mrb[0].mxu0
    %v190 = vadd.f32 %v104, %v189
    %191 = vdwg.mxu0
    %192 = vmatprep.subr.mxu0 %v82
    %193 = vmatpush1.msra.mxu0 %v81
    %194 = vmatprep.subr.mxu0 %v86
    %195 = vmatpush1.msra.mxu0 %v85
    %196 = vmatprep.subr.mxu0 %v90
    %197 = vmatpush1.msra.mxu0 %v89
    %198 = vmatprep.subr.mxu0 %v94
    %199 = vmatpush1.msra.mxu0 %v93
    %200 = vmatprep.subr.mxu0 0.0
    %201 = vmatpush1.msra.mxu0 0.0
    %202 = vmatprep.subr.mxu0 0.0
    %203 = vmatpush1.msra.mxu0 0.0
    %204 = vmatprep.subr.mxu0 0.0
    %205 = vmatpush1.msra.mxu0 0.0
    %206 = vmatprep.subr.mxu0 0.0
    %207 = vmatpush1.msra.mxu0 0.0
    %208 = vmatprep.subr.mxu0 0.0
    %209 = vmatpush1.msra.mxu0 0.0
    %210 = vmatprep.subr.mxu0 0.0
    %211 = vmatpush1.msra.mxu0 0.0
    %212 = vmatprep.subr.mxu0 0.0
    %213 = vmatpush1.msra.mxu0 0.0
    %214 = vmatprep.subr.mxu0 0.0
    %215 = vmatpush1.msra.mxu0 0.0
    %216 = vmatprep.subr.mxu0 0.0
    %217 = vmatpush1.msra.mxu0 0.0
    %218 = vmatprep.subr.mxu0 0.0
    %219 = vmatpush1.msra.mxu0 0.0
    %220 = vmatprep.subr.mxu0 0.0
    %221 = vmatpush1.msra.mxu0 0.0
    %222 = vmatprep.subr.mxu0 0.0
    %223 = vmatpush1.msra.mxu0 0.0
    %224 = vmatprep.subr.mxu0 0.0
    %225 = vmatpush1.msra.mxu0 0.0
    %226 = vmatprep.subr.mxu0 0.0
    %227 = vmatpush1.msra.mxu0 0.0
    %228 = vmatprep.subr.mxu0 0.0
    %229 = vmatpush1.msra.mxu0 0.0
    %230 = vmatprep.subr.mxu0 0.0
    %231 = vmatpush1.msra.mxu0 0.0
    %232 = vmatprep.subr.mxu0 0.0
    %233 = vmatpush1.msra.mxu0 0.0
    %234 = vmatprep.subr.mxu0 0.0
    %235 = vmatpush1.msra.mxu0 0.0
    %236 = vmatprep.subr.mxu0 0.0
    %237 = vmatpush1.msra.mxu0 0.0
    %238 = vmatprep.subr.mxu0 0.0
    %239 = vmatpush1.msra.mxu0 0.0
    %240 = vmatprep.subr.mxu0 0.0
    %241 = vmatpush1.msra.mxu0 0.0
    %242 = vmatprep.subr.mxu0 0.0
    %243 = vmatpush1.msra.mxu0 0.0
    %244 = vmatprep.subr.mxu0 0.0
    %245 = vmatpush1.msra.mxu0 0.0
    %246 = vmatprep.subr.mxu0 0.0
    %247 = vmatpush1.msra.mxu0 0.0
    %248 = vmatprep.subr.mxu0 0.0
    %249 = vmatpush1.msra.mxu0 0.0
    %250 = vmatprep.subr.mxu0 0.0
    %251 = vmatpush1.msra.mxu0 0.0
    %252 = vmatprep.subr.mxu0 0.0
    %253 = vmatpush1.msra.mxu0 0.0
    %254 = vmatprep.subr.mxu0 0.0
    %255 = vmatpush1.msra.mxu0 0.0
    %256 = vmatprep.mubr.f32.mxu0 0.0
    %257 = vmatmul.mubr.f32.gmra.mrb[0].mxu0 %v119
    %v258 = vpop.f32.mrb[0].mxu0
    %v259 = vadd.f32 %v108, %v258
    %v260 = vpop.f32.mrb[0].mxu0
    %v261 = vadd.f32 %v112, %v260
    %262 = vdwg.mxu0
    %v263 = vmax.f32 %v188, 0.0
    %v264 = vmax.f32 %v190, 0.0
    %v265 = vmax.f32 %v259, 0.0
    %v266 = vmax.f32 %v261, 0.0
    %v267 = vld [vmem:[#allocation5] sm:$0xff]
    %v268 = vld [vmem:[#allocation5 + $0x8] sm:$0xff]
    %v269 = vld [vmem:[#allocation5 + $0x10] sm:$0xff]
    %v270 = vld [vmem:[#allocation5 + $0x18] sm:$0xff]
    %v271 = vld [vmem:[#allocation5 + $0x20] sm:$0xff]
    %v272 = vld [vmem:[#allocation5 + $0x28] sm:$0xff]
    %v273 = vld [vmem:[#allocation5 + $0x30] sm:$0xff]
    %v274 = vld [vmem:[#allocation5 + $0x38] sm:$0xff]
    %v275 = vld [vmem:[#allocation5 + $0x40] sm:$0xff]
    %v276 = vld [vmem:[#allocation5 + $0x48] sm:$0xff]
    %v277 = vld [vmem:[#allocation5 + $0x50] sm:$0xff]
    %v278 = vld [vmem:[#allocation5 + $0x58] sm:$0xff]
    %v279 = vld [vmem:[#allocation5 + $0x60] sm:$0xff]
    %v280 = vld [vmem:[#allocation5 + $0x68] sm:$0xff]
    %v281 = vld [vmem:[#allocation5 + $0x70] sm:$0xff]
    %v282 = vld [vmem:[#allocation5 + $0x78] sm:$0xff]
    %v283 = vld [vmem:[#allocation5 + $0x80] sm:$0xff]
    %v284 = vld [vmem:[#allocation5 + $0x88] sm:$0xff]
    %v285 = vld [vmem:[#allocation5 + $0x90] sm:$0xff]
    %v286 = vld [vmem:[#allocation5 + $0x98] sm:$0xff]
    %v287 = vld [vmem:[#allocation5 + $0xa0] sm:$0xff]
    %v288 = vld [vmem:[#allocation5 + $0xa8] sm:$0xff]
    %v289 = vld [vmem:[#allocation5 + $0xb0] sm:$0xff]
    %v290 = vld [vmem:[#allocation5 + $0xb8] sm:$0xff]
    %v291 = vld [vmem:[#allocation5 + $0xc0] sm:$0xff]
    %v292 = vld [vmem:[#allocation5 + $0xc8] sm:$0xff]
    %v293 = vld [vmem:[#allocation5 + $0xd0] sm:$0xff]
    %v294 = vld [vmem:[#allocation5 + $0xd8] sm:$0xff]
    %v295 = vld [vmem:[#allocation5 + $0xe0] sm:$0xff]
    %v296 = vld [vmem:[#allocation5 + $0xe8] sm:$0xff]
    %v297 = vld [vmem:[#allocation5 + $0xf0] sm:$0xff]
    %v298 = vld [vmem:[#allocation5 + $0xf8] sm:$0xff]
    %v299 = vld [vmem:[#allocation5 + $0x100] sm:$0xff]
    %v300 = vld [vmem:[#allocation5 + $0x108] sm:$0xff]
    %v301 = vld [vmem:[#allocation5 + $0x110] sm:$0xff]
    %v302 = vld [vmem:[#allocation5 + $0x118] sm:$0xff]
    %v303 = vld [vmem:[#allocation5 + $0x120] sm:$0xff]
    %v304 = vld [vmem:[#allocation5 + $0x128] sm:$0xff]
    %v305 = vld [vmem:[#allocation5 + $0x130] sm:$0xff]
    %v306 = vld [vmem:[#allocation5 + $0x138] sm:$0xff]
    %v307 = vld [vmem:[#allocation5 + $0x140] sm:$0xff]
    %v308 = vld [vmem:[#allocation5 + $0x148] sm:$0xff]
    %v309 = vld [vmem:[#allocation5 + $0x150] sm:$0xff]
    %v310 = vld [vmem:[#allocation5 + $0x158] sm:$0xff]
    %v311 = vld [vmem:[#allocation5 + $0x160] sm:$0xff]
    %v312 = vld [vmem:[#allocation5 + $0x168] sm:$0xff]
    %v313 = vld [vmem:[#allocation5 + $0x170] sm:$0xff]
    %v314 = vld [vmem:[#allocation5 + $0x178] sm:$0xff]
    %v315 = vld [vmem:[#allocation5 + $0x180] sm:$0xff]
    %v316 = vld [vmem:[#allocation5 + $0x188] sm:$0xff]
    %v317 = vld [vmem:[#allocation5 + $0x190] sm:$0xff]
    %v318 = vld [vmem:[#allocation5 + $0x198] sm:$0xff]
    %v319 = vld [vmem:[#allocation5 + $0x1a0] sm:$0xff]
    %v320 = vld [vmem:[#allocation5 + $0x1a8] sm:$0xff]
    %v321 = vld [vmem:[#allocation5 + $0x1b0] sm:$0xff]
    %v322 = vld [vmem:[#allocation5 + $0x1b8] sm:$0xff]
    %v323 = vld [vmem:[#allocation5 + $0x1c0] sm:$0xff]
    %v324 = vld [vmem:[#allocation5 + $0x1c8] sm:$0xff]
    %v325 = vld [vmem:[#allocation5 + $0x1d0] sm:$0xff]
    %v326 = vld [vmem:[#allocation5 + $0x1d8] sm:$0xff]
    %v327 = vld [vmem:[#allocation5 + $0x1e0] sm:$0xff]
    %v328 = vld [vmem:[#allocation5 + $0x1e8] sm:$0xff]
    %v329 = vld [vmem:[#allocation5 + $0x1f0] sm:$0xff]
    %v330 = vld [vmem:[#allocation5 + $0x1f8] sm:$0xff]
    %v331 = vld [vmem:[#allocation5 + $0x200] sm:$0xff]
    %v332 = vld [vmem:[#allocation5 + $0x208] sm:$0xff]
    %v333 = vld [vmem:[#allocation5 + $0x210] sm:$0xff]
    %v334 = vld [vmem:[#allocation5 + $0x218] sm:$0xff]
    %v335 = vld [vmem:[#allocation5 + $0x220] sm:$0xff]
    %v336 = vld [vmem:[#allocation5 + $0x228] sm:$0xff]
    %v337 = vld [vmem:[#allocation5 + $0x230] sm:$0xff]
    %v338 = vld [vmem:[#allocation5 + $0x238] sm:$0xff]
    %v339 = vld [vmem:[#allocation5 + $0x240] sm:$0xff]
    %v340 = vld [vmem:[#allocation5 + $0x248] sm:$0xff]
    %v341 = vld [vmem:[#allocation5 + $0x250] sm:$0xff]
    %v342 = vld [vmem:[#allocation5 + $0x258] sm:$0xff]
    %v343 = vld [vmem:[#allocation5 + $0x260] sm:$0xff]
    %v344 = vld [vmem:[#allocation5 + $0x268] sm:$0xff]
    %v345 = vld [vmem:[#allocation5 + $0x270] sm:$0xff]
    %v346 = vld [vmem:[#allocation5 + $0x278] sm:$0xff]
    %v347 = vld [vmem:[#allocation5 + $0x280] sm:$0xff]
    %v348 = vld [vmem:[#allocation5 + $0x288] sm:$0xff]
    %v349 = vld [vmem:[#allocation5 + $0x290] sm:$0xff]
    %v350 = vld [vmem:[#allocation5 + $0x298] sm:$0xff]
    %v351 = vld [vmem:[#allocation5 + $0x2a0] sm:$0xff]
    %v352 = vld [vmem:[#allocation5 + $0x2a8] sm:$0xff]
    %v353 = vld [vmem:[#allocation5 + $0x2b0] sm:$0xff]
    %v354 = vld [vmem:[#allocation5 + $0x2b8] sm:$0xff]
    %v355 = vld [vmem:[#allocation5 + $0x2c0] sm:$0xff]
    %v356 = vld [vmem:[#allocation5 + $0x2c8] sm:$0xff]
    %v357 = vld [vmem:[#allocation5 + $0x2d0] sm:$0xff]
    %v358 = vld [vmem:[#allocation5 + $0x2d8] sm:$0xff]
    %v359 = vld [vmem:[#allocation5 + $0x2e0] sm:$0xff]
    %v360 = vld [vmem:[#allocation5 + $0x2e8] sm:$0xff]
    %v361 = vld [vmem:[#allocation5 + $0x2f0] sm:$0xff]
    %v362 = vld [vmem:[#allocation5 + $0x2f8] sm:$0xff]
    %v363 = vld [vmem:[#allocation5 + $0x300] sm:$0xff]
    %v364 = vld [vmem:[#allocation5 + $0x308] sm:$0xff]
    %v365 = vld [vmem:[#allocation5 + $0x310] sm:$0xff]
    %v366 = vld [vmem:[#allocation5 + $0x318] sm:$0xff]
    %v367 = vld [vmem:[#allocation5 + $0x320] sm:$0xff]
    %v368 = vld [vmem:[#allocation5 + $0x328] sm:$0xff]
    %v369 = vld [vmem:[#allocation5 + $0x330] sm:$0xff]
    %v370 = vld [vmem:[#allocation5 + $0x338] sm:$0xff]
    %v371 = vld [vmem:[#allocation5 + $0x340] sm:$0xff]
    %v372 = vld [vmem:[#allocation5 + $0x348] sm:$0xff]
    %v373 = vld [vmem:[#allocation5 + $0x350] sm:$0xff]
    %v374 = vld [vmem:[#allocation5 + $0x358] sm:$0xff]
    %v375 = vld [vmem:[#allocation5 + $0x360] sm:$0xff]
    %v376 = vld [vmem:[#allocation5 + $0x368] sm:$0xff]
    %v377 = vld [vmem:[#allocation5 + $0x370] sm:$0xff]
    %v378 = vld [vmem:[#allocation5 + $0x378] sm:$0xff]
    %v379 = vld [vmem:[#allocation5 + $0x380] sm:$0xff]
    %v380 = vld [vmem:[#allocation5 + $0x388] sm:$0xff]
    %v381 = vld [vmem:[#allocation5 + $0x390] sm:$0xff]
    %v382 = vld [vmem:[#allocation5 + $0x398] sm:$0xff]
    %v383 = vld [vmem:[#allocation5 + $0x3a0] sm:$0xff]
    %v384 = vld [vmem:[#allocation5 + $0x3a8] sm:$0xff]
    %v385 = vld [vmem:[#allocation5 + $0x3b0] sm:$0xff]
    %v386 = vld [vmem:[#allocation5 + $0x3b8] sm:$0xff]
    %v387 = vld [vmem:[#allocation5 + $0x3c0] sm:$0xff]
    %v388 = vld [vmem:[#allocation5 + $0x3c8] sm:$0xff]
    %v389 = vld [vmem:[#allocation5 + $0x3d0] sm:$0xff]
    %v390 = vld [vmem:[#allocation5 + $0x3d8] sm:$0xff]
    %v391 = vld [vmem:[#allocation5 + $0x3e0] sm:$0xff]
    %v392 = vld [vmem:[#allocation5 + $0x3e8] sm:$0xff]
    %v393 = vld [vmem:[#allocation5 + $0x3f0] sm:$0xff]
    %v394 = vld [vmem:[#allocation5 + $0x3f8] sm:$0xff]
    %v395 = vld [vmem:[%s4] sm:$0x3]
    %v397 = vlaneseq
    %v398 = vshrl.u32 %v397, 7
    %v399 = vsub.s32 0, %v398
    %v400 = vrot.slane %v395, %v399
    %v401 = vlaneseq
    %v402 = vshrl.u32 %v401, 7
    %v403 = vsub.s32 1, %v402
    %v404 = vrot.slane %v395, %v403
    %407 = vmatprep.subr.mxu0 %v268
    %408 = vmatpush1.msra.mxu0 %v267
    %409 = vmatprep.subr.mxu0 %v270
    %410 = vmatpush1.msra.mxu0 %v269
    %411 = vmatprep.subr.mxu0 %v272
    %412 = vmatpush1.msra.mxu0 %v271
    %413 = vmatprep.subr.mxu0 %v274
    %414 = vmatpush1.msra.mxu0 %v273
    %415 = vmatprep.subr.mxu0 %v276
    %416 = vmatpush1.msra.mxu0 %v275
    %417 = vmatprep.subr.mxu0 %v278
    %418 = vmatpush1.msra.mxu0 %v277
    %419 = vmatprep.subr.mxu0 %v280
    %420 = vmatpush1.msra.mxu0 %v279
    %421 = vmatprep.subr.mxu0 %v282
    %422 = vmatpush1.msra.mxu0 %v281
    %423 = vmatprep.subr.mxu0 %v284
    %424 = vmatpush1.msra.mxu0 %v283
    %425 = vmatprep.subr.mxu0 %v286
    %426 = vmatpush1.msra.mxu0 %v285
    %427 = vmatprep.subr.mxu0 %v288
    %428 = vmatpush1.msra.mxu0 %v287
    %429 = vmatprep.subr.mxu0 %v290
    %430 = vmatpush1.msra.mxu0 %v289
    %431 = vmatprep.subr.mxu0 %v292
    %432 = vmatpush1.msra.mxu0 %v291
    %433 = vmatprep.subr.mxu0 %v294
    %434 = vmatpush1.msra.mxu0 %v293
    %435 = vmatprep.subr.mxu0 %v296
    %436 = vmatpush1.msra.mxu0 %v295
    %437 = vmatprep.subr.mxu0 %v298
    %438 = vmatpush1.msra.mxu0 %v297
    %439 = vmatprep.subr.mxu0 %v300
    %440 = vmatpush1.msra.mxu0 %v299
    %441 = vmatprep.subr.mxu0 %v302
    %442 = vmatpush1.msra.mxu0 %v301
    %443 = vmatprep.subr.mxu0 %v304
    %444 = vmatpush1.msra.mxu0 %v303
    %445 = vmatprep.subr.mxu0 %v306
    %446 = vmatpush1.msra.mxu0 %v305
    %447 = vmatprep.subr.mxu0 %v308
    %448 = vmatpush1.msra.mxu0 %v307
    %449 = vmatprep.subr.mxu0 %v310
    %450 = vmatpush1.msra.mxu0 %v309
    %451 = vmatprep.subr.mxu0 %v312
    %452 = vmatpush1.msra.mxu0 %v311
    %453 = vmatprep.subr.mxu0 %v314
    %454 = vmatpush1.msra.mxu0 %v313
    %455 = vmatprep.subr.mxu0 %v316
    %456 = vmatpush1.msra.mxu0 %v315
    %457 = vmatprep.subr.mxu0 %v318
    %458 = vmatpush1.msra.mxu0 %v317
    %459 = vmatprep.subr.mxu0 %v320
    %460 = vmatpush1.msra.mxu0 %v319
    %461 = vmatprep.subr.mxu0 %v322
    %462 = vmatpush1.msra.mxu0 %v321
    %463 = vmatprep.subr.mxu0 %v324
    %464 = vmatpush1.msra.mxu0 %v323
    %465 = vmatprep.subr.mxu0 %v326
    %466 = vmatpush1.msra.mxu0 %v325
    %467 = vmatprep.subr.mxu0 %v328
    %468 = vmatpush1.msra.mxu0 %v327
    %469 = vmatprep.subr.mxu0 %v330
    %470 = vmatpush1.msra.mxu0 %v329
    %471 = vmatprep.mubr.f32.mxu0 %v264
    %472 = vmatmul.mubr.f32.gmra.mrb[0].mxu0 %v263
    %v473 = vpop.f32.mrb[0].mxu0
    %v474 = vadd.f32 %v400, %v473
    %v475 = vpop.f32.mrb[0].mxu0
    %v476 = vadd.f32 %v404, %v475
    %477 = vdwg.mxu0
    %478 = vmatprep.subr.mxu0 %v332
    %479 = vmatpush1.msra.mxu0 %v331
    %480 = vmatprep.subr.mxu0 %v334
    %481 = vmatpush1.msra.mxu0 %v333
    %482 = vmatprep.subr.mxu0 %v336
    %483 = vmatpush1.msra.mxu0 %v335
    %484 = vmatprep.subr.mxu0 %v338
    %485 = vmatpush1.msra.mxu0 %v337
    %486 = vmatprep.subr.mxu0 %v340
    %487 = vmatpush1.msra.mxu0 %v339
    %488 = vmatprep.subr.mxu0 %v342
    %489 = vmatpush1.msra.mxu0 %v341
    %490 = vmatprep.subr.mxu0 %v344
    %491 = vmatpush1.msra.mxu0 %v343
    %492 = vmatprep.subr.mxu0 %v346
    %493 = vmatpush1.msra.mxu0 %v345
    %494 = vmatprep.subr.mxu0 %v348
    %495 = vmatpush1.msra.mxu0 %v347
    %496 = vmatprep.subr.mxu0 %v350
    %497 = vmatpush1.msra.mxu0 %v349
    %498 = vmatprep.subr.mxu0 %v352
    %499 = vmatpush1.msra.mxu0 %v351
    %500 = vmatprep.subr.mxu0 %v354
    %501 = vmatpush1.msra.mxu0 %v353
    %502 = vmatprep.subr.mxu0 %v356
    %503 = vmatpush1.msra.mxu0 %v355
    %504 = vmatprep.subr.mxu0 %v358
    %505 = vmatpush1.msra.mxu0 %v357
    %506 = vmatprep.subr.mxu0 %v360
    %507 = vmatpush1.msra.mxu0 %v359
    %508 = vmatprep.subr.mxu0 %v362
    %509 = vmatpush1.msra.mxu0 %v361
    %510 = vmatprep.subr.mxu0 %v364
    %511 = vmatpush1.msra.mxu0 %v363
    %512 = vmatprep.subr.mxu0 %v366
    %513 = vmatpush1.msra.mxu0 %v365
    %514 = vmatprep.subr.mxu0 %v368
    %515 = vmatpush1.msra.mxu0 %v367
    %516 = vmatprep.subr.mxu0 %v370
    %517 = vmatpush1.msra.mxu0 %v369
    %518 = vmatprep.subr.mxu0 %v372
    %519 = vmatpush1.msra.mxu0 %v371
    %520 = vmatprep.subr.mxu0 %v374
    %521 = vmatpush1.msra.mxu0 %v373
    %522 = vmatprep.subr.mxu0 %v376
    %523 = vmatpush1.msra.mxu0 %v375
    %524 = vmatprep.subr.mxu0 %v378
    %525 = vmatpush1.msra.mxu0 %v377
    %526 = vmatprep.subr.mxu0 %v380
    %527 = vmatpush1.msra.mxu0 %v379
    %528 = vmatprep.subr.mxu0 %v382
    %529 = vmatpush1.msra.mxu0 %v381
    %530 = vmatprep.subr.mxu0 %v384
    %531 = vmatpush1.msra.mxu0 %v383
    %532 = vmatprep.subr.mxu0 %v386
    %533 = vmatpush1.msra.mxu0 %v385
    %534 = vmatprep.subr.mxu0 %v388
    %535 = vmatpush1.msra.mxu0 %v387
    %536 = vmatprep.subr.mxu0 %v390
    %537 = vmatpush1.msra.mxu0 %v389
    %538 = vmatprep.subr.mxu0 %v392
    %539 = vmatpush1.msra.mxu0 %v391
    %540 = vmatprep.subr.mxu0 %v394
    %541 = vmatpush1.msra.mxu0 %v393
    %542 = vmatprep.mubr.f32.mxu0 %v266
    %543 = vmatmul.mubr.f32.gmra.mrb[0].mxu0 %v265
    %v544 = vpop.f32.mrb[0].mxu0
    %v545 = vadd.f32 %v474, %v544
    %v546 = vpop.f32.mrb[0].mxu0
    %v547 = vadd.f32 %v476, %v546
    %548 = vdwg.mxu0
    %v549 = vmax.f32 %v545, 0.0
    %v550 = vmax.f32 %v547, 0.0
    %v551 = vld [vmem:[#allocation7] sm:$0xff]
    %v552 = vld [vmem:[#allocation7 + $0x8] sm:$0xff]
    %v553 = vld [vmem:[#allocation7 + $0x10] sm:$0xff]
    %v554 = vld [vmem:[#allocation7 + $0x18] sm:$0xff]
    %v555 = vld [vmem:[#allocation7 + $0x20] sm:$0xff]
    %v556 = vld [vmem:[#allocation7 + $0x28] sm:$0xff]
    %v557 = vld [vmem:[#allocation7 + $0x30] sm:$0xff]
    %v558 = vld [vmem:[#allocation7 + $0x38] sm:$0xff]
    %v559 = vld [vmem:[#allocation7 + $0x40] sm:$0xff]
    %v560 = vld [vmem:[#allocation7 + $0x48] sm:$0xff]
    %v561 = vld [vmem:[#allocation7 + $0x50] sm:$0xff]
    %v562 = vld [vmem:[#allocation7 + $0x58] sm:$0xff]
    %v563 = vld [vmem:[#allocation7 + $0x60] sm:$0xff]
    %v564 = vld [vmem:[#allocation7 + $0x68] sm:$0xff]
    %v565 = vld [vmem:[#allocation7 + $0x70] sm:$0xff]
    %v566 = vld [vmem:[#allocation7 + $0x78] sm:$0xff]
    %v567 = vld [vmem:[#allocation7 + $0x80] sm:$0xff]
    %v568 = vld [vmem:[#allocation7 + $0x88] sm:$0xff]
    %v569 = vld [vmem:[#allocation7 + $0x90] sm:$0xff]
    %v570 = vld [vmem:[#allocation7 + $0x98] sm:$0xff]
    %v571 = vld [vmem:[#allocation7 + $0xa0] sm:$0xff]
    %v572 = vld [vmem:[#allocation7 + $0xa8] sm:$0xff]
    %v573 = vld [vmem:[#allocation7 + $0xb0] sm:$0xff]
    %v574 = vld [vmem:[#allocation7 + $0xb8] sm:$0xff]
    %v575 = vld [vmem:[#allocation7 + $0xc0] sm:$0xff]
    %v576 = vld [vmem:[#allocation7 + $0xc8] sm:$0xff]
    %v577 = vld [vmem:[#allocation7 + $0xd0] sm:$0xff]
    %v578 = vld [vmem:[#allocation7 + $0xd8] sm:$0xff]
    %v579 = vld [vmem:[#allocation7 + $0xe0] sm:$0xff]
    %v580 = vld [vmem:[#allocation7 + $0xe8] sm:$0xff]
    %v581 = vld [vmem:[#allocation7 + $0xf0] sm:$0xff]
    %v582 = vld [vmem:[#allocation7 + $0xf8] sm:$0xff]
    %v583 = vld [vmem:[%s6] sm:$0x1]
    %v585 = vlaneseq
    %v586 = vshrl.u32 %v585, 7
    %v587 = vsub.s32 0, %v586
    %v588 = vrot.slane %v583, %v587
    %590 = vmatprep.subr.mxu0 0.0
    %591 = vmatpush1.msra.mxu0 %v551
    %592 = vmatprep.subr.mxu0 0.0
    %593 = vmatpush1.msra.mxu0 %v552
    %594 = vmatprep.subr.mxu0 0.0
    %595 = vmatpush1.msra.mxu0 %v553
    %596 = vmatprep.subr.mxu0 0.0
    %597 = vmatpush1.msra.mxu0 %v554
    %598 = vmatprep.subr.mxu0 0.0
    %599 = vmatpush1.msra.mxu0 %v555
    %600 = vmatprep.subr.mxu0 0.0
    %601 = vmatpush1.msra.mxu0 %v556
    %602 = vmatprep.subr.mxu0 0.0
    %603 = vmatpush1.msra.mxu0 %v557
    %604 = vmatprep.subr.mxu0 0.0
    %605 = vmatpush1.msra.mxu0 %v558
    %606 = vmatprep.subr.mxu0 0.0
    %607 = vmatpush1.msra.mxu0 %v559
    %608 = vmatprep.subr.mxu0 0.0
    %609 = vmatpush1.msra.mxu0 %v560
    %610 = vmatprep.subr.mxu0 0.0
    %611 = vmatpush1.msra.mxu0 %v561
    %612 = vmatprep.subr.mxu0 0.0
    %613 = vmatpush1.msra.mxu0 %v562
    %614 = vmatprep.subr.mxu0 0.0
    %615 = vmatpush1.msra.mxu0 %v563
    %616 = vmatprep.subr.mxu0 0.0
    %617 = vmatpush1.msra.mxu0 %v564
    %618 = vmatprep.subr.mxu0 0.0
    %619 = vmatpush1.msra.mxu0 %v565
    %620 = vmatprep.subr.mxu0 0.0
    %621 = vmatpush1.msra.mxu0 %v566
    %622 = vmatprep.subr.mxu0 0.0
    %623 = vmatpush1.msra.mxu0 %v567
    %624 = vmatprep.subr.mxu0 0.0
    %625 = vmatpush1.msra.mxu0 %v568
    %626 = vmatprep.subr.mxu0 0.0
    %627 = vmatpush1.msra.mxu0 %v569
    %628 = vmatprep.subr.mxu0 0.0
    %629 = vmatpush1.msra.mxu0 %v570
    %630 = vmatprep.subr.mxu0 0.0
    %631 = vmatpush1.msra.mxu0 %v571
    %632 = vmatprep.subr.mxu0 0.0
    %633 = vmatpush1.msra.mxu0 %v572
    %634 = vmatprep.subr.mxu0 0.0
    %635 = vmatpush1.msra.mxu0 %v573
    %636 = vmatprep.subr.mxu0 0.0
    %637 = vmatpush1.msra.mxu0 %v574
    %638 = vmatprep.subr.mxu0 0.0
    %639 = vmatpush1.msra.mxu0 %v575
    %640 = vmatprep.subr.mxu0 0.0
    %641 = vmatpush1.msra.mxu0 %v576
    %642 = vmatprep.subr.mxu0 0.0
    %643 = vmatpush1.msra.mxu0 %v577
    %644 = vmatprep.subr.mxu0 0.0
    %645 = vmatpush1.msra.mxu0 %v578
    %646 = vmatprep.subr.mxu0 0.0
    %647 = vmatpush1.msra.mxu0 %v579
    %648 = vmatprep.subr.mxu0 0.0
    %649 = vmatpush1.msra.mxu0 %v580
    %650 = vmatprep.subr.mxu0 0.0
    %651 = vmatpush1.msra.mxu0 %v581
    %652 = vmatprep.subr.mxu0 0.0
    %653 = vmatpush1.msra.mxu0 %v582
    %654 = vmatprep.mubr.f32.mxu0 %v550
    %655 = vmatmul.mubr.f32.gmra.mrb[0].mxu0 %v549
    %v656 = vpop.f32.mrb[0].mxu0
    %v657 = vadd.f32 %v588, %v656
    %v658 = vpop.f32.mrb[0].mxu0
    %659 = vdwg.mxu0
    %v660 = vmax.f32 %v657, 0.0
    %v661 = vld [vmem:[%s7] sm:$0xff]
    %v662 = vld [vmem:[%s7 + $0x8] sm:$0xff]
    %v663 = vld [vmem:[%s7 + $0x10] sm:$0xff]
    %v664 = vld [vmem:[%s7 + $0x18] sm:$0xff]
    %v665 = vld [vmem:[%s7 + $0x20] sm:$0xff]
    %v666 = vld [vmem:[%s7 + $0x28] sm:$0xff]
    %v667 = vld [vmem:[%s7 + $0x30] sm:$0xff]
    %v668 = vld [vmem:[%s7 + $0x38] sm:$0xff]
    %v669 = vld [vmem:[%s7 + $0x40] sm:$0xff]
    %v670 = vld [vmem:[%s7 + $0x48] sm:$0xff]
    %v671 = vld [vmem:[%s7 + $0x50] sm:$0xff]
    %v672 = vld [vmem:[%s7 + $0x58] sm:$0xff]
    %v673 = vld [vmem:[%s7 + $0x60] sm:$0xff]
    %v674 = vld [vmem:[%s7 + $0x68] sm:$0xff]
    %v675 = vld [vmem:[%s7 + $0x70] sm:$0xff]
    %v676 = vld [vmem:[%s7 + $0x78] sm:$0xff]
    %v677 = vld [vmem:[%s8] sm:$0x1]
    %v679 = vlaneseq
    %v680 = vshrl.u32 %v679, 7
    %v681 = vsub.s32 0, %v680
    %v682 = vrot.slane %v677, %v681
    %684 = vmatprep.subr.mxu0 0.0
    %685 = vmatpush1.msra.mxu0 %v661
    %686 = vmatprep.subr.mxu0 0.0
    %687 = vmatpush1.msra.mxu0 %v662
    %688 = vmatprep.subr.mxu0 0.0
    %689 = vmatpush1.msra.mxu0 %v663
    %690 = vmatprep.subr.mxu0 0.0
    %691 = vmatpush1.msra.mxu0 %v664
    %692 = vmatprep.subr.mxu0 0.0
    %693 = vmatpush1.msra.mxu0 %v665
    %694 = vmatprep.subr.mxu0 0.0
    %695 = vmatpush1.msra.mxu0 %v666
    %696 = vmatprep.subr.mxu0 0.0
    %697 = vmatpush1.msra.mxu0 %v667
    %698 = vmatprep.subr.mxu0 0.0
    %699 = vmatpush1.msra.mxu0 %v668
    %700 = vmatprep.subr.mxu0 0.0
    %701 = vmatpush1.msra.mxu0 %v669
    %702 = vmatprep.subr.mxu0 0.0
    %703 = vmatpush1.msra.mxu0 %v670
    %704 = vmatprep.subr.mxu0 0.0
    %705 = vmatpush1.msra.mxu0 %v671
    %706 = vmatprep.subr.mxu0 0.0
    %707 = vmatpush1.msra.mxu0 %v672
    %708 = vmatprep.subr.mxu0 0.0
    %709 = vmatpush1.msra.mxu0 %v673
    %710 = vmatprep.subr.mxu0 0.0
    %711 = vmatpush1.msra.mxu0 %v674
    %712 = vmatprep.subr.mxu0 0.0
    %713 = vmatpush1.msra.mxu0 %v675
    %714 = vmatprep.subr.mxu0 0.0
    %715 = vmatpush1.msra.mxu0 %v676
    %716 = vmatprep.subr.mxu0 0.0
    %717 = vmatpush1.msra.mxu0 0.0
    %718 = vmatprep.subr.mxu0 0.0
    %719 = vmatpush1.msra.mxu0 0.0
    %720 = vmatprep.subr.mxu0 0.0
    %721 = vmatpush1.msra.mxu0 0.0
    %722 = vmatprep.subr.mxu0 0.0
    %723 = vmatpush1.msra.mxu0 0.0
    %724 = vmatprep.subr.mxu0 0.0
    %725 = vmatpush1.msra.mxu0 0.0
    %726 = vmatprep.subr.mxu0 0.0
    %727 = vmatpush1.msra.mxu0 0.0
    %728 = vmatprep.subr.mxu0 0.0
    %729 = vmatpush1.msra.mxu0 0.0
    %730 = vmatprep.subr.mxu0 0.0
    %731 = vmatpush1.msra.mxu0 0.0
    %732 = vmatprep.subr.mxu0 0.0
    %733 = vmatpush1.msra.mxu0 0.0
    %734 = vmatprep.subr.mxu0 0.0
    %735 = vmatpush1.msra.mxu0 0.0
    %736 = vmatprep.subr.mxu0 0.0
    %737 = vmatpush1.msra.mxu0 0.0
    %738 = vmatprep.subr.mxu0 0.0
    %739 = vmatpush1.msra.mxu0 0.0
    %740 = vmatprep.subr.mxu0 0.0
    %741 = vmatpush1.msra.mxu0 0.0
    %742 = vmatprep.subr.mxu0 0.0
    %743 = vmatpush1.msra.mxu0 0.0
    %744 = vmatprep.subr.mxu0 0.0
    %745 = vmatpush1.msra.mxu0 0.0
    %746 = vmatprep.subr.mxu0 0.0
    %747 = vmatpush1.msra.mxu0 0.0
    %748 = vmatprep.mubr.f32.mxu0 0.0
    %749 = vmatmul.mubr.f32.gmra.mrb[0].mxu0 %v660
    %v750 = vpop.f32.mrb[0].mxu0
    %v751 = vadd.f32 %v682, %v750
    %v752 = vpop.f32.mrb[0].mxu0
    %753 = vdwg.mxu0
    %v754 = vmax.f32 %v751, 0.0
    %v755 = vld [vmem:[%s9] sm:$0xff]
    %v756 = vld [vmem:[%s9 + $0x8] sm:$0xff]
    %v757 = vld [vmem:[%s9 + $0x10] sm:$0xff]
    %v758 = vld [vmem:[%s9 + $0x18] sm:$0xff]
    %v759 = vld [vmem:[%s9 + $0x20] sm:$0xff]
    %v760 = vld [vmem:[%s9 + $0x28] sm:$0xff]
    %v761 = vld [vmem:[%s9 + $0x30] sm:$0xff]
    %v762 = vld [vmem:[%s9 + $0x38] sm:$0xff]
    %v763 = vld [vmem:[%s10] sm:$0x1]
    %v765 = vlaneseq
    %v766 = vshrl.u32 %v765, 7
    %v767 = vsub.s32 0, %v766
    %v768 = vrot.slane %v763, %v767
    %vm770 = vcmask 523264
    %v772 = vsel %vm770, %v754, 0
    %774 = vmatprep.subr.mxu0 0.0
    %775 = vmatpush1.msra.mxu0 %v755
    %776 = vmatprep.subr.mxu0 0.0
    %777 = vmatpush1.msra.mxu0 %v756
    %778 = vmatprep.subr.mxu0 0.0
    %779 = vmatpush1.msra.mxu0 %v757
    %780 = vmatprep.subr.mxu0 0.0
    %781 = vmatpush1.msra.mxu0 %v758
    %782 = vmatprep.subr.mxu0 0.0
    %783 = vmatpush1.msra.mxu0 %v759
    %784 = vmatprep.subr.mxu0 0.0
    %785 = vmatpush1.msra.mxu0 %v760
    %786 = vmatprep.subr.mxu0 0.0
    %787 = vmatpush1.msra.mxu0 %v761
    %788 = vmatprep.subr.mxu0 0.0
    %789 = vmatpush1.msra.mxu0 %v762
    %790 = vmatprep.subr.mxu0 0.0
    %791 = vmatpush1.msra.mxu0 0.0
    %792 = vmatprep.subr.mxu0 0.0
    %793 = vmatpush1.msra.mxu0 0.0
    %794 = vmatprep.subr.mxu0 0.0
    %795 = vmatpush1.msra.mxu0 0.0
    %796 = vmatprep.subr.mxu0 0.0
    %797 = vmatpush1.msra.mxu0 0.0
    %798 = vmatprep.subr.mxu0 0.0
    %799 = vmatpush1.msra.mxu0 0.0
    %800 = vmatprep.subr.mxu0 0.0
    %801 = vmatpush1.msra.mxu0 0.0
    %802 = vmatprep.subr.mxu0 0.0
    %803 = vmatpush1.msra.mxu0 0.0
    %804 = vmatprep.subr.mxu0 0.0
    %805 = vmatpush1.msra.mxu0 0.0
    %806 = vmatprep.subr.mxu0 0.0
    %807 = vmatpush1.msra.mxu0 0.0
    %808 = vmatprep.subr.mxu0 0.0
    %809 = vmatpush1.msra.mxu0 0.0
    %810 = vmatprep.subr.mxu0 0.0
    %811 = vmatpush1.msra.mxu0 0.0
    %812 = vmatprep.subr.mxu0 0.0
    %813 = vmatpush1.msra.mxu0 0.0
    %814 = vmatprep.subr.mxu0 0.0
    %815 = vmatpush1.msra.mxu0 0.0
    %816 = vmatprep.subr.mxu0 0.0
    %817 = vmatpush1.msra.mxu0 0.0
    %818 = vmatprep.subr.mxu0 0.0
    %819 = vmatpush1.msra.mxu0 0.0
    %820 = vmatprep.subr.mxu0 0.0
    %821 = vmatpush1.msra.mxu0 0.0
    %822 = vmatprep.subr.mxu0 0.0
    %823 = vmatpush1.msra.mxu0 0.0
    %824 = vmatprep.subr.mxu0 0.0
    %825 = vmatpush1.msra.mxu0 0.0
    %826 = vmatprep.subr.mxu0 0.0
    %827 = vmatpush1.msra.mxu0 0.0
    %828 = vmatprep.subr.mxu0 0.0
    %829 = vmatpush1.msra.mxu0 0.0
    %830 = vmatprep.subr.mxu0 0.0
    %831 = vmatpush1.msra.mxu0 0.0
    %832 = vmatprep.subr.mxu0 0.0
    %833 = vmatpush1.msra.mxu0 0.0
    %834 = vmatprep.subr.mxu0 0.0
    %835 = vmatpush1.msra.mxu0 0.0
    %836 = vmatprep.subr.mxu0 0.0
    %837 = vmatpush1.msra.mxu0 0.0
    %838 = vmatprep.mubr.f32.mxu0 0.0
    %839 = vmatmul.mubr.f32.gmra.mrb[0].mxu0 %v772
    %v840 = vpop.f32.mrb[0].mxu0
    %v841 = vadd.f32 %v768, %v840
    %v842 = vpop.f32.mrb[0].mxu0
    %843 = vdwg.mxu0
    %844 = vst [vmem:[#allocation8] sm:$0xff] %v841
    // Predicated region
    $region58: #{tpu_custom_call.1} parent=1 // pred_check
      _
    $region59: #{tpu_custom_call.1} parent=1 // pred_check_branch
      %846 = sbr.rel (0) target = $region61
    $region60: #{tpu_custom_call.1} parent=1 // pred_region
      %s848 = ssub.s32 128, 128
      %849 = vsyncadd [#allocation4], %s848
      %s851 = sshll.u32 [#allocation8], 4
      %s852 = int_to_ptr.vmem [resolvable:$true] %s851
      %854 = dma.vmem_to_hbm [thread:$0]  %s852, 128, %s11, [#allocation4]
    $region61: #{tpu_custom_call.1} parent=1 // pred_fallthru
      _
    // Predicated region
    $region62: #{tpu_custom_call.1} parent=1 // pred_check
      _
    $region63: #{tpu_custom_call.1} parent=1 // pred_check_branch
      %856 = sbr.rel (0) target = $region65
    $region64: #{tpu_custom_call.1} parent=1 // pred_region
      %857 = dma.done [#allocation4], 128
    $region65: #{tpu_custom_call.1} parent=1 // pred_fallthru
      _
    %858 = vsyncpa [#allocation3], 1
    %859 = vsyncpa [#allocation6], 1
    %860 = vsyncpa [#allocation4], 1

</llo_original>
